<compile_context>
chip_gen: v7x
topology: tpu7x:2x2x1
jax: 0.10.0
libtpu: 0.0.40
codegen_flags: <defaults>
</compile_context>

<pallas_src>
import functools

import jax
import jax.numpy as jnp
from jax.experimental import pallas as pl
from jax.experimental.pallas import tpu as pltpu


def _round_up(x, m):
    return ((x + m - 1) // m) * m


def _multi_task_loss_kernel(scores_ref, preds2_ref, targets_ref, out_ref,
                            acc_ref, *, lam, n_total, tile_n, ragged):
    i = pl.program_id(0)

    @pl.when(i == 0)
    def _init():
        acc_ref[0] = 0.0   # running sum of per-row cross-entropy
        acc_ref[1] = 0.0   # running sum of per-row smooth-L1

    scores = scores_ref[...].astype(jnp.float32)      # (tile_n, C)
    preds2 = preds2_ref[...].astype(jnp.float32)      # (tile_n, 2)
    tgt = targets_ref[...]                            # (tile_n, 1) int32

    tn, c = scores.shape
    col = jax.lax.broadcasted_iota(jnp.int32, (tn, c), 1)
    col2 = jax.lax.broadcasted_iota(jnp.int32, (tn, 2), 1)

    # --- CrossEntropy per row: lse_i - scores[i, tgt_i] (no logp tile) ---
    m = jnp.max(scores, axis=-1, keepdims=True)
    lse = jnp.log(jnp.sum(jnp.exp(scores - m), axis=-1, keepdims=True)) + m
    tgt_score = jnp.sum(jnp.where(col == tgt, scores, 0.0),
                        axis=-1, keepdims=True)
    ce_i = lse - tgt_score                            # (tile_n, 1)

    # --- indicator gather: column 0 (background) or 1 (foreground) ---
    ind = (tgt != 0).astype(jnp.int32)                # (tile_n, 1)
    sel_s = jnp.sum(jnp.where(col == ind, scores, 0.0),
                    axis=-1, keepdims=True)           # (tile_n, 1)
    sel_p = jnp.sum(jnp.where(col2 == ind, preds2, 0.0),
                    axis=-1, keepdims=True)           # (tile_n, 1)

    # --- SmoothL1 per row (beta = 1) ---
    d = sel_s - sel_p
    ad = jnp.abs(d)
    sl1_i = jnp.where(ad < 1.0, 0.5 * d * d, ad - 0.5)

    if ragged:
        # Mask out the out-of-bounds rows of the ragged last tile.  All the
        # math above is strictly per-row, and jnp.where is a select, so any
        # garbage/NaN produced from the padded rows never contaminates the
        # masked sums below.
        row = jax.lax.broadcasted_iota(jnp.int32, (tn, 1), 0)
        valid = (i * tile_n + row) < n_total          # (tile_n, 1) bool
        ce_i = jnp.where(valid, ce_i, 0.0)
        sl1_i = jnp.where(valid, sl1_i, 0.0)

    acc_ref[0] += jnp.sum(ce_i)
    acc_ref[1] += jnp.sum(sl1_i)

    @pl.when(i == pl.num_programs(0) - 1)
    def _finalize():
        total = (acc_ref[0] + lam * acc_ref[1]) / n_total
        out_ref[...] = jnp.full((8, 128), total, dtype=jnp.float32)


def multi_task_loss(scores, preds, targets, lam=1.0, tile_n=1024):
    """scores: (N, C) float, preds: (N, C) float, targets: (N,) int."""
    n, c = scores.shape
    assert c >= 2, "need at least background + one foreground class"

    # Only indicator columns 0/1 of preds are ever read by the loss.
    preds2 = preds[:, :2]
    targets2d = targets.astype(jnp.int32).reshape(n, 1)

    # Row tile: multiple of 8 (sublane), capped by (rounded-up) N. tile_n=1024
    # keeps 2 pipeline bufs x (scores + preds2 + targets) far under the v7x
    # 32 MiB scoped-VMEM default for any realistic C while amortizing the
    # per-grid-step overhead (~0.35 us/step).
    tn = _round_up(min(tile_n, _round_up(n, 8)), 8)
    n_tiles = pl.cdiv(n, tn)
    ragged = (n % tn) != 0   # compile masking in only when actually needed

    kernel = functools.partial(_multi_task_loss_kernel, lam=float(lam),
                               n_total=n, tile_n=tn, ragged=ragged)
    out = pl.pallas_call(
        kernel,
        out_shape=jax.ShapeDtypeStruct((8, 128), jnp.float32),
        grid=(n_tiles,),
        in_specs=[
            pl.BlockSpec((tn, c), lambda i: (i, 0)),   # scores tile
            pl.BlockSpec((tn, 2), lambda i: (i, 0)),   # preds indicator cols
            pl.BlockSpec((tn, 1), lambda i: (i, 0)),   # targets
        ],
        out_specs=pl.BlockSpec((8, 128), lambda i: (0, 0)),
        scratch_shapes=[pltpu.SMEM((2,), jnp.float32)],
        compiler_params=pltpu.CompilerParams(
            dimension_semantics=("arbitrary",)),
    )(scores, preds2, targets2d)
    return out[0, 0]


def _reference(scores, preds, targets, lam=1.0):
    scores = scores.astype(jnp.float32)
    preds = preds.astype(jnp.float32)
    n = targets.shape[0]
    logp = jax.nn.log_softmax(scores, axis=-1)
    ce = -jnp.mean(logp[jnp.arange(n), targets])
    ind = (targets != 0).astype(jnp.int32)
    sel_s = scores[jnp.arange(n), ind]
    sel_p = preds[jnp.arange(n), ind]
    d = sel_s - sel_p
    ad = jnp.abs(d)
    sl1 = jnp.mean(jnp.where(ad < 1.0, 0.5 * d * d, ad - 0.5))
    return ce + lam * sl1


if __name__ == "__main__":
    key = jax.random.PRNGKey(0)
    k1, k2, k3 = jax.random.split(key, 3)
    N, C = 37, 8  # 37 ROIs (exercises ragged-tile masking), 8 classes (0 = bg)

    scores = jax.random.normal(k1, (N, C), dtype=jnp.float32)
    preds = jax.random.normal(k2, (N, C), dtype=jnp.float32)
    targets = jax.random.randint(k3, (N,), 0, C, dtype=jnp.int32)

    # 1) Single ragged tile (tile covers all rows, 3 masked padding rows).
    loss1 = jax.block_until_ready(
        multi_task_loss(scores, preds, targets, lam=1.0))
    # 2) Multi-tile ragged path: tile_n=16 -> 3 grid steps, 11 masked rows.
    loss2 = jax.block_until_ready(
        multi_task_loss(scores, preds, targets, lam=0.5, tile_n=16))
    # 3) Exactly-divisible path (masking compiled out): first 32 rows, tile 16.
    loss3 = jax.block_until_ready(
        multi_task_loss(scores[:32], preds[:32], targets[:32],
                        lam=1.0, tile_n=16))

    ref1 = _reference(scores, preds, targets, lam=1.0)
    ref2 = _reference(scores, preds, targets, lam=0.5)
    ref3 = _reference(scores[:32], preds[:32], targets[:32], lam=1.0)
    assert jnp.allclose(loss1, ref1, rtol=1e-5, atol=1e-5), (loss1, ref1)
    assert jnp.allclose(loss2, ref2, rtol=1e-5, atol=1e-5), (loss2, ref2)
    assert jnp.allclose(loss3, ref3, rtol=1e-5, atol=1e-5), (loss3, ref3)
    print("KERNEL_OK")
</pallas_src>

<mosaic_0001>
module attributes {stable_mosaic.version = 11 : i64} {
  func.func @_multi_task_loss_kernel(%arg0: i32, %arg1: memref<40x8xf32, #tpu.memory_space<vmem>>, %arg2: memref<40x2xf32, #tpu.memory_space<vmem>>, %arg3: memref<40x1xi32, #tpu.memory_space<vmem>>, %arg4: memref<8x128xf32, #tpu.memory_space<vmem>>, %arg5: memref<2xf32, #tpu.memory_space<smem>>) attributes {dimension_semantics = [#tpu.dimension_semantics<arbitrary>], iteration_bounds = array<i64: 1>, scalar_prefetch = 0 : i64, scratch_operands = 1 : i64, tpu.core_type = #tpu.core_type<tc>, window_params = [{transform_indices = @transform_0, window_bounds = array<i64: 40, 8>}, {transform_indices = @transform_1, window_bounds = array<i64: 40, 2>}, {transform_indices = @transform_2, window_bounds = array<i64: 40, 1>}, {pipeline_mode = #tpu.pipeline_mode<synchronous>, transform_indices = @transform_3, window_bounds = array<i64: 8, 128>}]} {
    %c0_i32 = arith.constant 0 : i32
    %0 = arith.cmpi eq, %arg0, %c0_i32 : i32
    %1 = arith.extui %0 : i1 to i32
    %c0_i32_0 = arith.constant 0 : i32
    %2 = arith.cmpi ne, %1, %c0_i32_0 : i32
    scf.if %2 {
      %cst_26 = arith.constant 0.000000e+00 : f32
      %c0_27 = arith.constant 0 : index
      %76 = memref.load %arg5[%c0_27] : memref<2xf32, #tpu.memory_space<smem>>
      memref.store %cst_26, %arg5[%c0_27] : memref<2xf32, #tpu.memory_space<smem>>
      %cst_28 = arith.constant 0.000000e+00 : f32
      %c1_29 = arith.constant 1 : index
      %77 = memref.load %arg5[%c1_29] : memref<2xf32, #tpu.memory_space<smem>>
      memref.store %cst_28, %arg5[%c1_29] : memref<2xf32, #tpu.memory_space<smem>>
    } else {
    }
    %c0 = arith.constant 0 : index
    %c0_1 = arith.constant 0 : index
    %3 = vector.load %arg1[%c0, %c0_1] : memref<40x8xf32, #tpu.memory_space<vmem>>, vector<40x8xf32>
    %c0_2 = arith.constant 0 : index
    %c0_3 = arith.constant 0 : index
    %4 = vector.load %arg2[%c0_2, %c0_3] : memref<40x2xf32, #tpu.memory_space<vmem>>, vector<40x2xf32>
    %c0_4 = arith.constant 0 : index
    %c0_5 = arith.constant 0 : index
    %5 = vector.load %arg3[%c0_4, %c0_5] : memref<40x1xi32, #tpu.memory_space<vmem>>, vector<40x1xi32>
    %6 = tpu.iota {dimensions = array<i32: 1>} : vector<40x8xi32>
    %7 = tpu.iota {dimensions = array<i32: 1>} : vector<40x2xi32>
    %cst = arith.constant dense<0xFF800000> : vector<40xf32>
    %8 = vector.multi_reduction <maximumf>, %3, %cst [1] : vector<40x8xf32> to vector<40xf32>
    %9 = vector.shape_cast %8 : vector<40xf32> to vector<40x1xf32>
    %10 = vector.broadcast %9 : vector<40x1xf32> to vector<40x8xf32>
    %11 = arith.subf %3, %10 : vector<40x8xf32>
    %12 = math.exp %11 : vector<40x8xf32>
    %cst_6 = arith.constant dense<0.000000e+00> : vector<40xf32>
    %13 = vector.multi_reduction <add>, %12, %cst_6 [1] : vector<40x8xf32> to vector<40xf32>
    %14 = vector.shape_cast %13 : vector<40xf32> to vector<40x1xf32>
    %15 = math.log %14 : vector<40x1xf32>
    %16 = arith.addf %15, %9 : vector<40x1xf32>
    %17 = vector.broadcast %5 : vector<40x1xi32> to vector<40x8xi32>
    %18 = arith.cmpi eq, %6, %17 : vector<40x8xi32>
    %cst_7 = arith.constant 0.000000e+00 : f32
    %19 = vector.broadcast %cst_7 : f32 to vector<40x8xf32>
    %20 = arith.select %18, %3, %19 : vector<40x8xi1>, vector<40x8xf32>
    %cst_8 = arith.constant dense<0.000000e+00> : vector<40xf32>
    %21 = vector.multi_reduction <add>, %20, %cst_8 [1] : vector<40x8xf32> to vector<40xf32>
    %22 = vector.shape_cast %21 : vector<40xf32> to vector<40x1xf32>
    %23 = arith.subf %16, %22 : vector<40x1xf32>
    %c0_i32_9 = arith.constant 0 : i32
    %24 = vector.broadcast %c0_i32_9 : i32 to vector<40x1xi32>
    %25 = arith.cmpi ne, %5, %24 : vector<40x1xi32>
    %26 = arith.extui %25 : vector<40x1xi1> to vector<40x1xi32>
    %27 = vector.broadcast %26 : vector<40x1xi32> to vector<40x8xi32>
    %28 = arith.cmpi eq, %6, %27 : vector<40x8xi32>
    %cst_10 = arith.constant 0.000000e+00 : f32
    %29 = vector.broadcast %cst_10 : f32 to vector<40x8xf32>
    %30 = arith.select %28, %3, %29 : vector<40x8xi1>, vector<40x8xf32>
    %cst_11 = arith.constant dense<0.000000e+00> : vector<40xf32>
    %31 = vector.multi_reduction <add>, %30, %cst_11 [1] : vector<40x8xf32> to vector<40xf32>
    %32 = vector.shape_cast %31 : vector<40xf32> to vector<40x1xf32>
    %33 = vector.broadcast %26 : vector<40x1xi32> to vector<40x2xi32>
    %34 = arith.cmpi eq, %7, %33 : vector<40x2xi32>
    %cst_12 = arith.constant 0.000000e+00 : f32
    %35 = vector.broadcast %cst_12 : f32 to vector<40x2xf32>
    %36 = arith.select %34, %4, %35 : vector<40x2xi1>, vector<40x2xf32>
    %cst_13 = arith.constant dense<0.000000e+00> : vector<40xf32>
    %37 = vector.multi_reduction <add>, %36, %cst_13 [1] : vector<40x2xf32> to vector<40xf32>
    %38 = vector.shape_cast %37 : vector<40xf32> to vector<40x1xf32>
    %39 = arith.subf %32, %38 : vector<40x1xf32>
    %40 = math.absf %39 : vector<40x1xf32>
    %cst_14 = arith.constant 1.000000e+00 : f32
    %41 = vector.broadcast %cst_14 : f32 to vector<40x1xf32>
    %42 = arith.cmpf olt, %40, %41 : vector<40x1xf32>
    %cst_15 = arith.constant 5.000000e-01 : f32
    %43 = vector.broadcast %cst_15 : f32 to vector<40x1xf32>
    %44 = arith.mulf %43, %39 : vector<40x1xf32>
    %45 = arith.mulf %44, %39 : vector<40x1xf32>
    %cst_16 = arith.constant 5.000000e-01 : f32
    %46 = vector.broadcast %cst_16 : f32 to vector<40x1xf32>
    %47 = arith.subf %40, %46 : vector<40x1xf32>
    %48 = arith.select %42, %45, %47 : vector<40x1xi1>, vector<40x1xf32>
    %49 = tpu.iota {dimensions = array<i32: 0>} : vector<40x1xi32>
    %c40_i32 = arith.constant 40 : i32
    %50 = arith.muli %arg0, %c40_i32 : i32
    %51 = vector.broadcast %50 : i32 to vector<40x1xi32>
    %52 = arith.addi %51, %49 : vector<40x1xi32>
    %c37_i32 = arith.constant 37 : i32
    %53 = vector.broadcast %c37_i32 : i32 to vector<40x1xi32>
    %54 = arith.cmpi slt, %52, %53 : vector<40x1xi32>
    %cst_17 = arith.constant 0.000000e+00 : f32
    %55 = vector.broadcast %cst_17 : f32 to vector<40x1xf32>
    %56 = arith.select %54, %23, %55 : vector<40x1xi1>, vector<40x1xf32>
    %cst_18 = arith.constant 0.000000e+00 : f32
    %57 = vector.broadcast %cst_18 : f32 to vector<40x1xf32>
    %58 = arith.select %54, %48, %57 : vector<40x1xi1>, vector<40x1xf32>
    %c0_19 = arith.constant 0 : index
    %59 = memref.load %arg5[%c0_19] : memref<2xf32, #tpu.memory_space<smem>>
    %60 = vector.shape_cast %56 : vector<40x1xf32> to vector<1x40x1xf32>
    %cst_20 = arith.constant dense<0.000000e+00> : vector<1xf32>
    %61 = vector.multi_reduction <add>, %60, %cst_20 [1, 2] : vector<1x40x1xf32> to vector<1xf32>
    %62 = vector.shape_cast %61 : vector<1xf32> to vector<1x1x1xf32>
    %63 = vector.extract %62[0, 0, 0] : f32 from vector<1x1x1xf32>
    %64 = arith.addf %59, %63 : f32
    %c0_21 = arith.constant 0 : index
    %65 = memref.load %arg5[%c0_21] : memref<2xf32, #tpu.memory_space<smem>>
    memref.store %64, %arg5[%c0_21] : memref<2xf32, #tpu.memory_space<smem>>
    %c1 = arith.constant 1 : index
    %66 = memref.load %arg5[%c1] : memref<2xf32, #tpu.memory_space<smem>>
    %67 = vector.shape_cast %58 : vector<40x1xf32> to vector<1x40x1xf32>
    %cst_22 = arith.constant dense<0.000000e+00> : vector<1xf32>
    %68 = vector.multi_reduction <add>, %67, %cst_22 [1, 2] : vector<1x40x1xf32> to vector<1xf32>
    %69 = vector.shape_cast %68 : vector<1xf32> to vector<1x1x1xf32>
    %70 = vector.extract %69[0, 0, 0] : f32 from vector<1x1x1xf32>
    %71 = arith.addf %66, %70 : f32
    %c1_23 = arith.constant 1 : index
    %72 = memref.load %arg5[%c1_23] : memref<2xf32, #tpu.memory_space<smem>>
    memref.store %71, %arg5[%c1_23] : memref<2xf32, #tpu.memory_space<smem>>
    %c0_i32_24 = arith.constant 0 : i32
    %73 = arith.cmpi eq, %arg0, %c0_i32_24 : i32
    %74 = arith.extui %73 : i1 to i32
    %c0_i32_25 = arith.constant 0 : i32
    %75 = arith.cmpi ne, %74, %c0_i32_25 : i32
    scf.if %75 {
      %c0_26 = arith.constant 0 : index
      %76 = memref.load %arg5[%c0_26] : memref<2xf32, #tpu.memory_space<smem>>
      %c1_27 = arith.constant 1 : index
      %77 = memref.load %arg5[%c1_27] : memref<2xf32, #tpu.memory_space<smem>>
      %cst_28 = arith.constant 1.000000e+00 : f32
      %78 = arith.mulf %cst_28, %77 : f32
      %79 = arith.addf %76, %78 : f32
      %cst_29 = arith.constant 3.700000e+01 : f32
      %80 = arith.divf %79, %cst_29 : f32
      %81 = vector.broadcast %80 : f32 to vector<8x128xf32>
      %c0_30 = arith.constant 0 : index
      %c0_31 = arith.constant 0 : index
      %82 = vector.load %arg4[%c0_30, %c0_31] : memref<8x128xf32, #tpu.memory_space<vmem>>, vector<8x128xf32>
      tpu.vector_store %arg4[%c0_30, %c0_31], %81 {strides = array<i32>} : memref<8x128xf32, #tpu.memory_space<vmem>>, vector<8x128xf32>,
    } else {
    }
    return
  }
  func.func @transform_0(%arg0: i32) -> (i32, i32) {
    %c0_i32 = arith.constant 0 : i32
    %c0_i32_0 = arith.constant 0 : i32
    return %arg0, %c0_i32 : i32, i32
  }
  func.func @transform_1(%arg0: i32) -> (i32, i32) {
    %c0_i32 = arith.constant 0 : i32
    %c0_i32_0 = arith.constant 0 : i32
    return %arg0, %c0_i32 : i32, i32
  }
  func.func @transform_2(%arg0: i32) -> (i32, i32) {
    %c0_i32 = arith.constant 0 : i32
    %c0_i32_0 = arith.constant 0 : i32
    return %arg0, %c0_i32 : i32, i32
  }
  func.func @transform_3(%arg0: i32) -> (i32, i32) {
    %c0_i32 = arith.constant 0 : i32
    %c0_i32_0 = arith.constant 0 : i32
    %c0_i32_1 = arith.constant 0 : i32
    return %c0_i32, %c0_i32_0 : i32, i32
  }
}

</mosaic_0001>

<llo_original>
// kernel: tpu_custom_call.1
$region0: #{tpu_custom_call.1}
  #allocation0 [shape = 'u32[]', space=smem, size = 0x4, offset = 0x4, fixed_abs, tag = 'smem constant byte address 0x4 - core index']
  #allocation1 [shape = 'u32[144,128]{1,0:T(1,128)}', space=vmem, size = 0x12000, scoped, tag = 'internal scratch']
  #allocation2 [shape = 'f32[2]{0:T(128)}', space=smem, size = 0x200, scoped, tag = 'scratch operand']
  %s0 = inlined_call_operand.vmem [shape: f32[37,8], index: 0, kind: input, shape index: {}]
  %s1 = inlined_call_operand.vmem [shape: f32[37,2], index: 1, kind: input, shape index: {}]
  %s2 = inlined_call_operand.vmem [shape: s32[37,1], index: 2, kind: input, shape index: {}]
  %s3 = inlined_call_operand.hbm [shape: f32[8,128], index: 3, kind: output, shape index: {}]
  %s4 = sld [smem:[#allocation0]]
  $region30: #{tpu_custom_call.1} parent=0
    _
  %s6 = ssub.s32 1, %s4
  %s7 = scalar_select 0, %s6, %s4
  $region1: #{tpu_custom_call.1} parent=0
    #allocation3 [shape = 'u8[4096]{0}', space=vmem, size = 0x1000, scoped, tag = 'output window, operand 0, single buffered']
    #allocation4 [shape = 's32[1]{0}', space=sflag, size = 0x4, scoped, tag = 'scoped memory for tpu_custom_call.1']
    %8 = vsyncpa [#allocation4], 0
    // Predicated region
    $region2: #{tpu_custom_call.1} parent=1 // pred_check
      _
    $region3: #{tpu_custom_call.1} parent=1 // pred_check_branch
      %10 = sbr.rel (0) target = $region5
    $region4: #{tpu_custom_call.1} parent=1 // pred_region
      _
    $region5: #{tpu_custom_call.1} parent=1 // pred_fallthru
      _
    // Predicated region
    $region6: #{tpu_custom_call.1} parent=1 // pred_check
      _
    $region7: #{tpu_custom_call.1} parent=1 // pred_check_branch
      %12 = sbr.rel (0) target = $region9
    $region8: #{tpu_custom_call.1} parent=1 // pred_region
      _
    $region9: #{tpu_custom_call.1} parent=1 // pred_fallthru
      _
    // Predicated region
    $region10: #{tpu_custom_call.1} parent=1 // pred_check
      _
    $region11: #{tpu_custom_call.1} parent=1 // pred_check_branch
      %14 = sbr.rel (0) target = $region13
    $region12: #{tpu_custom_call.1} parent=1 // pred_region
      _
    $region13: #{tpu_custom_call.1} parent=1 // pred_fallthru
      _
    %p15 = scmp.eq.s32.totalorder 0, 0
    // Predicated region
    $region14: #{tpu_custom_call.1} parent=1 // pred_check
      %p16 = pneg %p15
    $region15: #{tpu_custom_call.1} parent=1 // pred_check_branch
      %18 = sbr.rel (%p16) target = $region17
    $region16: #{tpu_custom_call.1} parent=1 // pred_region
      %s19 = scalar_lea.smem [#allocation2], 0
      %20 = sst [smem:[%s19]] 0.0
      %s21 = scalar_lea.smem [#allocation2], 1
      %22 = sst [smem:[%s21]] 0.0
    $region17: #{tpu_custom_call.1} parent=1 // pred_fallthru
      _
    %v23 = vld [vmem:[%s0] sm:$0xff]
    %v24 = vld [vmem:[%s0 + $0x8] sm:$0xff]
    %v25 = vld [vmem:[%s0 + $0x10] sm:$0xff]
    %v26 = vld [vmem:[%s0 + $0x18] sm:$0xff]
    %v27 = vld [vmem:[%s0 + $0x20] sm:$0xff]
    %v28 = vld [vmem:[%s1] sm:$0xff]
    %v29 = vld [vmem:[%s1 + $0x8] sm:$0xff]
    %v30 = vld [vmem:[%s1 + $0x10] sm:$0xff]
    %v31 = vld [vmem:[%s1 + $0x18] sm:$0xff]
    %v32 = vld [vmem:[%s1 + $0x20] sm:$0xff]
    %v33 = vld [vmem:[%s2] sm:$0xff]
    %v34 = vld [vmem:[%s2 + $0x8] sm:$0xff]
    %v35 = vld [vmem:[%s2 + $0x10] sm:$0xff]
    %v36 = vld [vmem:[%s2 + $0x18] sm:$0xff]
    %v37 = vld [vmem:[%s2 + $0x20] sm:$0xff]
    %v38 = vlaneseq
    %v39 = vand.u32 %v38, 127
    %vm40 = vcmask 64512
    %v41 = vsel %vm40, %v23, -inf
    %42 = vmax.xlane.f32.xlu0 %v41
    %v43 = vpop.xlane.xlu0 %42
    %v44 = vsel %vm40, %v24, -inf
    %45 = vmax.xlane.f32.xlu0 %v44
    %v46 = vpop.xlane.xlu0 %45
    %v47 = vsel %vm40, %v25, -inf
    %48 = vmax.xlane.f32.xlu0 %v47
    %v49 = vpop.xlane.xlu0 %48
    %v50 = vsel %vm40, %v26, -inf
    %51 = vmax.xlane.f32.xlu0 %v50
    %v52 = vpop.xlane.xlu0 %51
    %v53 = vsel %vm40, %v27, -inf
    %54 = vmax.xlane.f32.xlu0 %v53
    %v55 = vpop.xlane.xlu0 %54
    %v56 = vsub.f32 %v23, %v43
    %v57 = vsub.f32 %v24, %v46
    %v58 = vsub.f32 %v25, %v49
    %v59 = vsub.f32 %v26, %v52
    %v60 = vsub.f32 %v27, %v55
    %v61 = vmul.f32 %v56, 1.442695
    %v62 = vpow.pop %v61
    %v63 = vmul.f32 %v57, 1.442695
    %v64 = vpow.pop %v63
    %v65 = vmul.f32 %v58, 1.442695
    %v66 = vpow.pop %v65
    %v67 = vmul.f32 %v59, 1.442695
    %v68 = vpow.pop %v67
    %v69 = vmul.f32 %v60, 1.442695
    %v70 = vpow.pop %v69
    %v71 = vsel %vm40, %v62, 0.0
    %72 = vadd.xlane.f32.xlu0 %v71
    %v73 = vpop.xlane.xlu0 %72
    %v74 = vsel %vm40, %v64, 0.0
    %75 = vadd.xlane.f32.xlu0 %v74
    %v76 = vpop.xlane.xlu0 %75
    %v77 = vsel %vm40, %v66, 0.0
    %78 = vadd.xlane.f32.xlu0 %v77
    %v79 = vpop.xlane.xlu0 %78
    %v80 = vsel %vm40, %v68, 0.0
    %81 = vadd.xlane.f32.xlu0 %v80
    %v82 = vpop.xlane.xlu0 %81
    %v83 = vsel %vm40, %v70, 0.0
    %84 = vadd.xlane.f32.xlu0 %v83
    %v85 = vpop.xlane.xlu0 %84
    %v86 = vlog2.pop %v73
    %v87 = vmul.f32 %v86, 0.6931472
    %v88 = vlog2.pop %v76
    %v89 = vmul.f32 %v88, 0.6931472
    %v90 = vlog2.pop %v79
    %v91 = vmul.f32 %v90, 0.6931472
    %v92 = vlog2.pop %v82
    %v93 = vmul.f32 %v92, 0.6931472
    %v94 = vlog2.pop %v85
    %v95 = vmul.f32 %v94, 0.6931472
    %v96 = vadd.f32 %v87, %v43
    %v97 = vadd.f32 %v89, %v46
    %v98 = vadd.f32 %v91, %v49
    %v99 = vadd.f32 %v93, %v52
    %v100 = vadd.f32 %v95, %v55
    %101 = vset.pattern.permute.xlu0 0
    %102 = vperm.xlu0 %101, %v33
    %v103 = vpop.permute.xlu0 %102
    %104 = vset.pattern.permute.xlu0 0
    %105 = vperm.xlu0 %104, %v34
    %v106 = vpop.permute.xlu0 %105
    %107 = vset.pattern.permute.xlu0 0
    %108 = vperm.xlu0 %107, %v35
    %v109 = vpop.permute.xlu0 %108
    %110 = vset.pattern.permute.xlu0 0
    %111 = vperm.xlu0 %110, %v36
    %v112 = vpop.permute.xlu0 %111
    %113 = vset.pattern.permute.xlu0 0
    %114 = vperm.xlu0 %113, %v37
    %v115 = vpop.permute.xlu0 %114
    %vm116 = vcmp.eq.s32.totalorder %v39, %v103
    %vm117 = vcmp.eq.s32.totalorder %v39, %v106
    %vm118 = vcmp.eq.s32.totalorder %v39, %v109
    %vm119 = vcmp.eq.s32.totalorder %v39, %v112
    %vm120 = vcmp.eq.s32.totalorder %v39, %v115
    %v121 = vsel %vm116, %v23, 0.0
    %v122 = vsel %vm117, %v24, 0.0
    %v123 = vsel %vm118, %v25, 0.0
    %v124 = vsel %vm119, %v26, 0.0
    %v125 = vsel %vm120, %v27, 0.0
    %v126 = vsel %vm40, %v121, 0.0
    %127 = vadd.xlane.f32.xlu0 %v126
    %v128 = vpop.xlane.xlu0 %127
    %v129 = vsel %vm40, %v122, 0.0
    %130 = vadd.xlane.f32.xlu0 %v129
    %v131 = vpop.xlane.xlu0 %130
    %v132 = vsel %vm40, %v123, 0.0
    %133 = vadd.xlane.f32.xlu0 %v132
    %v134 = vpop.xlane.xlu0 %133
    %v135 = vsel %vm40, %v124, 0.0
    %136 = vadd.xlane.f32.xlu0 %v135
    %v137 = vpop.xlane.xlu0 %136
    %v138 = vsel %vm40, %v125, 0.0
    %139 = vadd.xlane.f32.xlu0 %v138
    %v140 = vpop.xlane.xlu0 %139
    %v141 = vsub.f32 %v96, %v128
    %v142 = vsub.f32 %v97, %v131
    %v143 = vsub.f32 %v98, %v134
    %v144 = vsub.f32 %v99, %v137
    %v145 = vsub.f32 %v100, %v140
    %vm146 = vcmp.ne.s32.totalorder %v33, 0
    %vm147 = vcmp.ne.s32.totalorder %v34, 0
    %vm148 = vcmp.ne.s32.totalorder %v35, 0
    %vm149 = vcmp.ne.s32.totalorder %v36, 0
    %vm150 = vcmp.ne.s32.totalorder %v37, 0
    %v151 = vsel %vm146, 1, 0
    %v152 = vsel %vm147, 1, 0
    %v153 = vsel %vm148, 1, 0
    %v154 = vsel %vm149, 1, 0
    %v155 = vsel %vm150, 1, 0
    %156 = vset.pattern.permute.xlu0 0
    %157 = vperm.xlu0 %156, %v151
    %v158 = vpop.permute.xlu0 %157
    %159 = vset.pattern.permute.xlu0 0
    %160 = vperm.xlu0 %159, %v152
    %v161 = vpop.permute.xlu0 %160
    %162 = vset.pattern.permute.xlu0 0
    %163 = vperm.xlu0 %162, %v153
    %v164 = vpop.permute.xlu0 %163
    %165 = vset.pattern.permute.xlu0 0
    %166 = vperm.xlu0 %165, %v154
    %v167 = vpop.permute.xlu0 %166
    %168 = vset.pattern.permute.xlu0 0
    %169 = vperm.xlu0 %168, %v155
    %v170 = vpop.permute.xlu0 %169
    %vm171 = vcmp.eq.s32.totalorder %v39, %v158
    %vm172 = vcmp.eq.s32.totalorder %v39, %v161
    %vm173 = vcmp.eq.s32.totalorder %v39, %v164
    %vm174 = vcmp.eq.s32.totalorder %v39, %v167
    %vm175 = vcmp.eq.s32.totalorder %v39, %v170
    %v176 = vsel %vm171, %v23, 0.0
    %v177 = vsel %vm172, %v24, 0.0
    %v178 = vsel %vm173, %v25, 0.0
    %v179 = vsel %vm174, %v26, 0.0
    %v180 = vsel %vm175, %v27, 0.0
    %v181 = vsel %vm40, %v176, 0.0
    %182 = vadd.xlane.f32.xlu0 %v181
    %v183 = vpop.xlane.xlu0 %182
    %v184 = vsel %vm40, %v177, 0.0
    %185 = vadd.xlane.f32.xlu0 %v184
    %v186 = vpop.xlane.xlu0 %185
    %v187 = vsel %vm40, %v178, 0.0
    %188 = vadd.xlane.f32.xlu0 %v187
    %v189 = vpop.xlane.xlu0 %188
    %v190 = vsel %vm40, %v179, 0.0
    %191 = vadd.xlane.f32.xlu0 %v190
    %v192 = vpop.xlane.xlu0 %191
    %v193 = vsel %vm40, %v180, 0.0
    %194 = vadd.xlane.f32.xlu0 %v193
    %v195 = vpop.xlane.xlu0 %194
    %v196 = vsel %vm171, %v28, 0.0
    %v197 = vsel %vm172, %v29, 0.0
    %v198 = vsel %vm173, %v30, 0.0
    %v199 = vsel %vm174, %v31, 0.0
    %v200 = vsel %vm175, %v32, 0.0
    %vm201 = vcmask 15360
    %v202 = vsel %vm201, %v196, 0.0
    %203 = vadd.xlane.f32.xlu0 %v202
    %v204 = vpop.xlane.xlu0 %203
    %v205 = vsel %vm201, %v197, 0.0
    %206 = vadd.xlane.f32.xlu0 %v205
    %v207 = vpop.xlane.xlu0 %206
    %v208 = vsel %vm201, %v198, 0.0
    %209 = vadd.xlane.f32.xlu0 %v208
    %v210 = vpop.xlane.xlu0 %209
    %v211 = vsel %vm201, %v199, 0.0
    %212 = vadd.xlane.f32.xlu0 %v211
    %v213 = vpop.xlane.xlu0 %212
    %v214 = vsel %vm201, %v200, 0.0
    %215 = vadd.xlane.f32.xlu0 %v214
    %v216 = vpop.xlane.xlu0 %215
    %v217 = vsub.f32 %v183, %v204
    %v218 = vsub.f32 %v186, %v207
    %v219 = vsub.f32 %v189, %v210
    %v220 = vsub.f32 %v192, %v213
    %v221 = vsub.f32 %v195, %v216
    %v222 = vand.u32 2147483647, %v217
    %v223 = vand.u32 2147483647, %v218
    %v224 = vand.u32 2147483647, %v219
    %v225 = vand.u32 2147483647, %v220
    %v226 = vand.u32 2147483647, %v221
    %vm227 = vcmp.lt.f32.partialorder %v222, 1.0
    %vm228 = vcmp.lt.f32.partialorder %v223, 1.0
    %vm229 = vcmp.lt.f32.partialorder %v224, 1.0
    %vm230 = vcmp.lt.f32.partialorder %v225, 1.0
    %vm231 = vcmp.lt.f32.partialorder %v226, 1.0
    %v232 = vmul.f32 %v217, 0.5
    %v233 = vmul.f32 %v218, 0.5
    %v234 = vmul.f32 %v219, 0.5
    %v235 = vmul.f32 %v220, 0.5
    %v236 = vmul.f32 %v221, 0.5
    %v237 = vmul.f32 %v232, %v217
    %v238 = vmul.f32 %v233, %v218
    %v239 = vmul.f32 %v234, %v219
    %v240 = vmul.f32 %v235, %v220
    %v241 = vmul.f32 %v236, %v221
    %v242 = vsub.f32 %v222, 0.5
    %v243 = vsub.f32 %v223, 0.5
    %v244 = vsub.f32 %v224, 0.5
    %v245 = vsub.f32 %v225, 0.5
    %v246 = vsub.f32 %v226, 0.5
    %v247 = vsel %vm227, %v237, %v242
    %v248 = vsel %vm228, %v238, %v243
    %v249 = vsel %vm229, %v239, %v244
    %v250 = vsel %vm230, %v240, %v245
    %v251 = vsel %vm231, %v241, %v246
    %v252 = vlaneseq
    %v253 = vshrl.u32 %v252, 7
    %v254 = vadd.s32 %v253, 8
    %v255 = vadd.s32 %v253, 16
    %v256 = vadd.s32 %v253, 24
    %v257 = vadd.s32 %v253, 32
    %s258 = smul.u32 0, 40
    %v259 = vstv %s258
    %v260 = vadd.s32 %v259, %v253
    %v261 = vadd.s32 %v259, %v254
    %v262 = vadd.s32 %v259, %v255
    %v263 = vadd.s32 %v259, %v256
    %v264 = vadd.s32 %v259, %v257
    %vm265 = vcmp.lt.s32.totalorder %v260, 37
    %vm266 = vcmp.lt.s32.totalorder %v261, 37
    %vm267 = vcmp.lt.s32.totalorder %v262, 37
    %vm268 = vcmp.lt.s32.totalorder %v263, 37
    %vm269 = vcmp.lt.s32.totalorder %v264, 37
    %v270 = vsel %vm265, %v141, 0.0
    %v271 = vsel %vm266, %v142, 0.0
    %v272 = vsel %vm267, %v143, 0.0
    %v273 = vsel %vm268, %v144, 0.0
    %v274 = vsel %vm269, %v145, 0.0
    %v275 = vsel %vm265, %v247, 0.0
    %v276 = vsel %vm266, %v248, 0.0
    %v277 = vsel %vm267, %v249, 0.0
    %v278 = vsel %vm268, %v250, 0.0
    %v279 = vsel %vm269, %v251, 0.0
    %s280 = sld [smem:[#allocation2]]
    %vm281 = vcmask 7168
    %v282 = vsel %vm281, %v270, 0.0
    %v283 = vsel %vm281, %v271, 0.0
    %v284 = vadd.f32 %v282, %v283
    %v285 = vsel %vm281, %v272, 0.0
    %v286 = vadd.f32 %v284, %v285
    %v287 = vsel %vm281, %v273, 0.0
    %v288 = vadd.f32 %v286, %v287
    %v289 = vsel %vm281, %v274, 0.0
    %v290 = vadd.f32 %v288, %v289
    %291 = vadd.xlane.f32.xlu0 %v290
    %v292 = vpop.xlane.xlu0 %291
    %v293 = vrot.slane %v292, 4
    %v294 = vadd.f32 %v292, %v293
    %v295 = vrot.slane %v294, 2
    %v296 = vadd.f32 %v294, %v295
    %v297 = vrot.slane %v296, 1
    %v298 = vadd.f32 %v296, %v297
    %s299 = vtos %v298
    %s300 = sadd.f32 %s280, %s299
    %s301 = scalar_lea.smem [#allocation2], 0
    %302 = sst [smem:[%s301]] %s300
    %s303 = sld [smem:[#allocation2 + $0x1]]
    %v304 = vsel %vm281, %v275, 0.0
    %v305 = vsel %vm281, %v276, 0.0
    %v306 = vadd.f32 %v304, %v305
    %v307 = vsel %vm281, %v277, 0.0
    %v308 = vadd.f32 %v306, %v307
    %v309 = vsel %vm281, %v278, 0.0
    %v310 = vadd.f32 %v308, %v309
    %v311 = vsel %vm281, %v279, 0.0
    %v312 = vadd.f32 %v310, %v311
    %313 = vadd.xlane.f32.xlu0 %v312
    %v314 = vpop.xlane.xlu0 %313
    %v315 = vrot.slane %v314, 4
    %v316 = vadd.f32 %v314, %v315
    %v317 = vrot.slane %v316, 2
    %v318 = vadd.f32 %v316, %v317
    %v319 = vrot.slane %v318, 1
    %v320 = vadd.f32 %v318, %v319
    %s321 = vtos %v320
    %s322 = sadd.f32 %s303, %s321
    %s323 = scalar_lea.smem [#allocation2], 1
    %324 = sst [smem:[%s323]] %s322
    // Predicated region
    $region18: #{tpu_custom_call.1} parent=1 // pred_check
      %p325 = pneg %p15
    $region19: #{tpu_custom_call.1} parent=1 // pred_check_branch
      %327 = sbr.rel (%p325) target = $region21
    $region20: #{tpu_custom_call.1} parent=1 // pred_region
      %s328 = sld [smem:[#allocation2]]
      %s329 = sld [smem:[#allocation2 + $0x1]]
      %s330 = sadd.f32 %s328, %s329
      %v331 = vrcp.pop 37.0
      %s332 = vtos %v331
      %s333 = smul.f32 %s330, %s332
      %v334 = vstv %s333
      %335 = vst [vmem:[#allocation3] sm:$0xff] %v334
    $region21: #{tpu_custom_call.1} parent=1 // pred_fallthru
      _
    // Predicated region
    $region22: #{tpu_custom_call.1} parent=1 // pred_check
      _
    $region23: #{tpu_custom_call.1} parent=1 // pred_check_branch
      %337 = sbr.rel (0) target = $region25
    $region24: #{tpu_custom_call.1} parent=1 // pred_region
      %s339 = ssub.s32 128, 128
      %340 = vsyncadd [#allocation4], %s339
      %s342 = sshll.u32 [#allocation3], 4
      %s343 = int_to_ptr.vmem [resolvable:$true] %s342
      %345 = dma.vmem_to_hbm [thread:$0]  %s343, 128, %s3, [#allocation4]
    $region25: #{tpu_custom_call.1} parent=1 // pred_fallthru
      _
    // Predicated region
    $region26: #{tpu_custom_call.1} parent=1 // pred_check
      _
    $region27: #{tpu_custom_call.1} parent=1 // pred_check_branch
      %347 = sbr.rel (0) target = $region29
    $region28: #{tpu_custom_call.1} parent=1 // pred_region
      %348 = dma.done [#allocation4], 128
    $region29: #{tpu_custom_call.1} parent=1 // pred_fallthru
      _
    %349 = vsyncpa [#allocation4], 1

</llo_original>
